<compile_context>
chip_gen: v6e
topology: v6e:2x2x1
jax: 0.10.0
libtpu: 0.0.40
codegen_flags: <defaults>
</compile_context>

<pallas_src>
import jax
import jax.numpy as jnp
from jax.experimental import pallas as pl
from jax.experimental.pallas import tpu as pltpu


PATCH_SIZE = 14                                   # P
EMB_DIM = 64                                      # E
IMG_HW = 56                                       # H = W
GRID_SIDE = IMG_HW // PATCH_SIZE                  # 4 patches per side
NUM_PATCHES = GRID_SIDE * GRID_SIDE               # 16
PATCH_DIM = PATCH_SIZE * PATCH_SIZE               # 196
ROWGROUP_DIM = PATCH_SIZE * IMG_HW                # 784 = one 14x56 pixel strip
OUT_COLS = GRID_SIDE * EMB_DIM                    # 256 = 4 patches x 64 emb

MAX_TR = 2048          # row-groups per grid step (512 batch elems, ~6.3 MiB image)
VMEM_LIMIT = 32 << 20  # fits the ~20 MiB peak on every generation (v7x: 64 MiB phys)


def _patch_proj_kernel(x_ref, w_ref, b_ref, o_ref):
    """One fused patchify + projection matmul per grid step.

    x_ref: (TR, 784)  flattened patch row-groups (14 image rows x 56 cols)
    w_ref: (784, 256) block-diagonal flattened weight, bf16 (VMEM-resident)
    b_ref: (1, 256)   bias tiled over the 4 patch columns
    o_ref: (TR, 256)  lane-dense output; column j*64 + e = patch (i, j), emb e
    """
    x = x_ref[...]
    if x.dtype != jnp.bfloat16:
        x = x.astype(jnp.bfloat16)            # bf16 MXU inputs, f32 accumulation
    acc = jnp.dot(x, w_ref[...], preferred_element_type=jnp.float32)
    o_ref[...] = (acc + b_ref[...]).astype(o_ref.dtype)


def _expand_weight(weight):
    """(196, 64) -> block-diagonal (784, 256).

    Row p*56 + j*14 + q, column k*64 + e holds W[p*14 + q, e] iff j == k, else 0,
    so a raw 14x56 image strip (flattened row-major) matmul'ed against it yields
    the embeddings of all 4 patches of that strip directly.
    """
    w3 = weight.reshape(PATCH_SIZE, PATCH_SIZE, EMB_DIM)        # [p, q, e]
    eye = jnp.eye(GRID_SIDE, dtype=weight.dtype)                # [j, k]
    wbd = jnp.einsum("pqe,jk->pjqke", w3, eye)                  # [p, j, q, k, e]
    return wbd.reshape(ROWGROUP_DIM, OUT_COLS)


def _pick_tile(ng):
    """Row-groups per grid step: as large as the VMEM budget allows, but keep
    >= 2 grid steps (v7x megacore sharding) whenever there is enough work."""
    if ng <= 8:
        return ng                                   # tiny: single full-extent block
    half = pl.cdiv(ng, 2)
    tr = min(MAX_TR, half)
    tr = min(((tr + 7) // 8) * 8, ng)               # sublane-aligned block rows
    return tr


def feature_extractor(x, weight, bias):
    """
    x:      (B, 1, 56, 56) float32 (or bfloat16 for halved HBM traffic)
    weight: (196, 64)  float32  (transposed vs torch's (out, in))
    bias:   (64,)      float32
    returns (B, 16, 64) float32
    """
    B = x.shape[0]
    ng = B * GRID_SIDE                                    # 4 row-groups per image
    img = x.reshape(ng, ROWGROUP_DIM)                     # free row-major reshape
    wflat = _expand_weight(weight).astype(jnp.bfloat16)   # ~392 KiB, VMEM-resident
    bias_t = jnp.tile(bias, GRID_SIDE).reshape(1, OUT_COLS).astype(jnp.float32)

    tr = _pick_tile(ng)
    grid = (pl.cdiv(ng, tr),)

    cost = pl.CostEstimate(
        # actual MXU work (4x the logical 196-wide contraction: block-diag zeros)
        flops=2 * ng * ROWGROUP_DIM * OUT_COLS,
        transcendentals=0,
        bytes_accessed=(img.size * img.dtype.itemsize
                        + wflat.size * wflat.dtype.itemsize
                        + bias_t.size * 4
                        + ng * OUT_COLS * 4),
    )

    out = pl.pallas_call(
        _patch_proj_kernel,
        out_shape=jax.ShapeDtypeStruct((ng, OUT_COLS), jnp.float32),
        grid_spec=pltpu.PrefetchScalarGridSpec(
            num_scalar_prefetch=0,
            grid=grid,
            in_specs=[
                # image strips: the only streamed operand (contiguous DMA per step)
                pl.BlockSpec((tr, ROWGROUP_DIM), lambda g: (g, 0)),
                # weight / bias: grid-invariant index maps -> fetched once, resident
                pl.BlockSpec((ROWGROUP_DIM, OUT_COLS), lambda g: (0, 0)),
                pl.BlockSpec((1, OUT_COLS), lambda g: (0, 0)),
            ],
            out_specs=pl.BlockSpec((tr, OUT_COLS), lambda g: (g, 0)),
        ),
        compiler_params=pltpu.CompilerParams(
            dimension_semantics=("parallel",),    # batch axis shards across TCs
            vmem_limit_bytes=VMEM_LIMIT,
        ),
        cost_estimate=cost,
    )(img, wflat, bias_t)

    # free reshape: row g=(b,i), col j*64+e  ->  (B, 16, 64) with patch = i*4+j
    return out.reshape(B, NUM_PATCHES, EMB_DIM)


def init_params(key):
    """Deterministic init matching nn.Linear(196, 64) shapes (uniform +-1/sqrt(in))."""
    kw, kb = jax.random.split(key)
    bound = 1.0 / (PATCH_DIM ** 0.5)
    weight = jax.random.uniform(kw, (PATCH_DIM, EMB_DIM), jnp.float32, -bound, bound)
    bias = jax.random.uniform(kb, (EMB_DIM,), jnp.float32, -bound, bound)
    return weight, bias


def _reference(x, weight, bias):
    """Plain-JAX f32 reference matching torch unfold(2,14,14).unfold(3,14,14) + Linear."""
    B = x.shape[0]
    p = x[:, 0].reshape(B, GRID_SIDE, PATCH_SIZE, GRID_SIDE, PATCH_SIZE)
    p = jnp.transpose(p, (0, 1, 3, 2, 4)).reshape(B * NUM_PATCHES, PATCH_DIM)
    return (p.astype(jnp.float32) @ weight + bias[None, :]).reshape(
        B, NUM_PATCHES, EMB_DIM)


if __name__ == "__main__":
    key = jax.random.PRNGKey(0)
    kx, kp = jax.random.split(key)

    weight, bias = init_params(kp)
    fe = jax.jit(feature_extractor)

    # Primary check: B=2 (8 row-groups, single grid step).
    B = 2
    x = jax.random.normal(kx, (B, 1, IMG_HW, IMG_HW), jnp.float32)
    out = jax.block_until_ready(fe(x, weight, bias))
    ref = _reference(x, weight, bias)
    assert out.shape == (B, NUM_PATCHES, EMB_DIM), out.shape
    err = float(jnp.max(jnp.abs(out - ref)))
    assert err < 2e-2, err            # bf16 dot inputs with f32 accumulation

    # Partial-final-block check: B=3 -> 12 row-groups, tile 8, grid of 2.
    B2 = 3
    x2 = jax.random.normal(kx, (B2, 1, IMG_HW, IMG_HW), jnp.float32)
    out2 = jax.block_until_ready(fe(x2, weight, bias))
    ref2 = _reference(x2, weight, bias)
    assert out2.shape == (B2, NUM_PATCHES, EMB_DIM), out2.shape
    err2 = float(jnp.max(jnp.abs(out2 - ref2)))
    assert err2 < 2e-2, err2

    print("KERNEL_OK")
</pallas_src>

<mosaic_0001>
module attributes {stable_mosaic.version = 11 : i64} {
  func.func @_patch_proj_kernel(%arg0: i32, %arg1: memref<8x784xf32, #tpu.memory_space<vmem>>, %arg2: memref<784x256xbf16, #tpu.memory_space<vmem>>, %arg3: memref<1x256xf32, #tpu.memory_space<vmem>>, %arg4: memref<8x256xf32, #tpu.memory_space<vmem>>) attributes {dimension_semantics = [#tpu.dimension_semantics<parallel>], iteration_bounds = array<i64: 1>, scalar_prefetch = 0 : i64, scratch_operands = 0 : i64, tpu.core_type = #tpu.core_type<tc>, window_params = [{transform_indices = @transform_0, window_bounds = array<i64: 8, 784>}, {pipeline_mode = #tpu.pipeline_mode<synchronous>, transform_indices = @transform_1, window_bounds = array<i64: 784, 256>}, {pipeline_mode = #tpu.pipeline_mode<synchronous>, transform_indices = @transform_2, window_bounds = array<i64: 1, 256>}, {transform_indices = @transform_3, window_bounds = array<i64: 8, 256>}]} {
    %c0 = arith.constant 0 : index
    %c0_0 = arith.constant 0 : index
    %0 = vector.load %arg1[%c0, %c0_0] : memref<8x784xf32, #tpu.memory_space<vmem>>, vector<8x784xf32>
    %1 = arith.truncf %0 : vector<8x784xf32> to vector<8x784xbf16>
    %c0_1 = arith.constant 0 : index
    %c0_2 = arith.constant 0 : index
    %2 = vector.load %arg2[%c0_1, %c0_2] : memref<784x256xbf16, #tpu.memory_space<vmem>>, vector<784x256xbf16>
    %cst = arith.constant dense<0.000000e+00> : vector<8x256xf32>
    %3 = tpu.matmul %1, %2, %cst {dimension_numbers = #tpu.dot_dimension_numbers<[1], [0], [0], [1], [0, 0, 1, 1], [], []>} : vector<8x784xbf16>, vector<784x256xbf16>, vector<8x256xf32> -> vector<8x256xf32>
    %c0_3 = arith.constant 0 : index
    %c0_4 = arith.constant 0 : index
    %4 = vector.load %arg3[%c0_3, %c0_4] : memref<1x256xf32, #tpu.memory_space<vmem>>, vector<1x256xf32>
    %5 = vector.broadcast %4 : vector<1x256xf32> to vector<8x256xf32>
    %6 = arith.addf %3, %5 : vector<8x256xf32>
    %c0_5 = arith.constant 0 : index
    %c0_6 = arith.constant 0 : index
    %7 = vector.load %arg4[%c0_5, %c0_6] : memref<8x256xf32, #tpu.memory_space<vmem>>, vector<8x256xf32>
    tpu.vector_store %arg4[%c0_5, %c0_6], %6 {strides = array<i32>} : memref<8x256xf32, #tpu.memory_space<vmem>>, vector<8x256xf32>,
    return
  }
  func.func @transform_0(%arg0: i32) -> (i32, i32) {
    %c0_i32 = arith.constant 0 : i32
    %c0_i32_0 = arith.constant 0 : i32
    return %arg0, %c0_i32 : i32, i32
  }
  func.func @transform_1(%arg0: i32) -> (i32, i32) {
    %c0_i32 = arith.constant 0 : i32
    %c0_i32_0 = arith.constant 0 : i32
    %c0_i32_1 = arith.constant 0 : i32
    return %c0_i32, %c0_i32_0 : i32, i32
  }
  func.func @transform_2(%arg0: i32) -> (i32, i32) {
    %c0_i32 = arith.constant 0 : i32
    %c0_i32_0 = arith.constant 0 : i32
    %c0_i32_1 = arith.constant 0 : i32
    return %c0_i32, %c0_i32_0 : i32, i32
  }
  func.func @transform_3(%arg0: i32) -> (i32, i32) {
    %c0_i32 = arith.constant 0 : i32
    %c0_i32_0 = arith.constant 0 : i32
    return %arg0, %c0_i32 : i32, i32
  }
}

</mosaic_0001>

<llo_original>
// kernel: tile.8
$region0: #{tile.8}
  #allocation0 [shape = 's32[1]{0}', space=sflag, size = 0x4, scoped, tag = 'scoped memory for tile.8']
  %s0 = inlined_call_operand.vmem [shape: f32[64], index: 0, kind: input, shape index: {}]
  %s1 = inlined_call_operand.vmem [shape: f32[4,64], index: 1, kind: output, shape index: {}]
  // Predicated region
  $region2: #{tile.8} parent=0 // pred_check
    _
  $region3: #{tile.8} parent=0 // pred_check_branch
    %3 = sbr.rel (0) target = $region5
  $region4: #{tile.8} parent=0 // pred_region
    _
  $region5: #{tile.8} parent=0 // pred_fallthru
    _
  %v4 = vld [vmem:[%s0] ss:$0 sm:$0xff]
  %5 = vst [vmem:[%s1] sm:$0xf] %v4

// kernel: tile.9
$region0: #{tile.9}
  %s0 = inlined_call_operand.vmem [shape: f32[4,64], index: 0, kind: input, shape index: {}]
  %s1 = inlined_call_operand.vmem [shape: f32[1,256], index: 1, kind: output, shape index: {}]
  $region1: #{tile.9} parent=0
    #allocation0 [shape = 'u8[8192]{0}', space=vmem, size = 0x2000, scoped, tag = 'scoped mem for output reshape']
    #allocation1 [shape = 'u8[4096]{0}', space=vmem, size = 0x1000, scoped, tag = 'scoped mem for input reshape']
    %s3 = sshll.u32 1, 4
    %s4 = ssub.s32 %s3, 1
    %v5 = vld [vmem:[%s0] sm:%s4]
    %6 = vst [vmem:[#allocation1] sm:%s4] %v5
    %s7 = smov 3
    %v8 = vld [vmem:[#allocation1] ss:$2 sm:%s7]
    %vm9 = vcmask 523264
    %10 = vst.msk [vmem:[#allocation0] ss:$8 sm:$0x3] %vm9, %v8
    %s11 = scalar_lea.vmem [#allocation1], 1
    %s12 = smov 3
    %v13 = vld [vmem:[%s11] ss:$2 sm:%s12]
    %14 = vrot.lane.b32.xlu0 %v13, 64
    %v15 = vpop.permute.xlu0 %14
    %vm16 = vcmask 1048064
    %17 = vst.msk [vmem:[#allocation0] ss:$8 sm:$0x3] %vm16, %v15
    %s19 = sshll.u32 1, 1
    %s20 = ssub.s32 %s19, 1
    %v22 = vld [vmem:[#allocation0] sm:%s20]
    %s23 = sshll.u32 1, 1
    %s24 = ssub.s32 %s23, 1
    %25 = vst [vmem:[%s1] sm:%s24] %v22
    %s26 = scalar_lea.vmem [#allocation0], 8
    %v27 = vld [vmem:[%s26] sm:%s20]
    %s28 = sshll.u32 1, 1
    %s29 = ssub.s32 %s28, 1
    %s30 = scalar_lea.vmem %s1, 1
    %31 = vst [vmem:[%s30] sm:%s29] %v27

// kernel: feature_extractor.1
$region0: #{feature_extractor.1}
  #allocation0 [shape = 'u32[]', space=smem, size = 0x4, offset = 0x4, fixed_abs, tag = 'smem constant byte address 0x4 - core index']
  #allocation1 [shape = 'u32[144,128]{1,0:T(1,128)}', space=vmem, size = 0x12000, scoped, tag = 'internal scratch']
  %s0 = inlined_call_operand.vmem [shape: f32[8,784], index: 0, kind: input, shape index: {}]
  %s1 = inlined_call_operand.vmem [shape: bf16[784,256], index: 1, kind: input, shape index: {}]
  %s2 = inlined_call_operand.vmem [shape: f32[1,256], index: 2, kind: input, shape index: {}]
  %s3 = inlined_call_operand.vmem [shape: f32[8,256], index: 3, kind: output, shape index: {}]
  %s4 = sld [smem:[#allocation0]]
  $region22: #{feature_extractor.1} parent=0
    _
  %s6 = ssub.s32 1, %s4
  %s7 = scalar_select 0, %s6, %s4
  // Predicated region
  $region2: #{feature_extractor.1} parent=0 // pred_check
    _
  $region3: #{feature_extractor.1} parent=0 // pred_check_branch
    %9 = sbr.rel (0) target = $region5
  $region4: #{feature_extractor.1} parent=0 // pred_region
    _
  $region5: #{feature_extractor.1} parent=0 // pred_fallthru
    _
  // Predicated region
  $region6: #{feature_extractor.1} parent=0 // pred_check
    _
  $region7: #{feature_extractor.1} parent=0 // pred_check_branch
    %11 = sbr.rel (0) target = $region9
  $region8: #{feature_extractor.1} parent=0 // pred_region
    _
  $region9: #{feature_extractor.1} parent=0 // pred_fallthru
    _
  // Predicated region
  $region10: #{feature_extractor.1} parent=0 // pred_check
    _
  $region11: #{feature_extractor.1} parent=0 // pred_check_branch
    %13 = sbr.rel (0) target = $region13
  $region12: #{feature_extractor.1} parent=0 // pred_region
    _
  $region13: #{feature_extractor.1} parent=0 // pred_fallthru
    _
  %v15 = vld [vmem:[%s0] sm:$0xff]
  %v16 = vld [vmem:[%s0 + $0x8] sm:$0xff]
  %v17 = vld [vmem:[%s0 + $0x10] sm:$0xff]
  %v18 = vld [vmem:[%s0 + $0x18] sm:$0xff]
  %v19 = vld [vmem:[%s0 + $0x20] sm:$0xff]
  %v20 = vld [vmem:[%s0 + $0x28] sm:$0xff]
  %v21 = vld [vmem:[%s0 + $0x30] sm:$0xff]
  %v22 = vpack.c.bf16 %v15, %v15
  %v23 = vpack.c.bf16 %v16, %v16
  %v24 = vpack.c.bf16 %v17, %v17
  %v25 = vpack.c.bf16 %v18, %v18
  %v26 = vpack.c.bf16 %v19, %v19
  %v27 = vpack.c.bf16 %v20, %v20
  %v28 = vpack.c.bf16 %v21, %v21
  %v29 = vld [vmem:[%s1] sm:$0xff]
  %v30 = vld [vmem:[%s1 + $0x8] sm:$0xff]
  %v31 = vld [vmem:[%s1 + $0x10] sm:$0xff]
  %v32 = vld [vmem:[%s1 + $0x18] sm:$0xff]
  %v33 = vld [vmem:[%s1 + $0x20] sm:$0xff]
  %v34 = vld [vmem:[%s1 + $0x28] sm:$0xff]
  %v35 = vld [vmem:[%s1 + $0x30] sm:$0xff]
  %v36 = vld [vmem:[%s1 + $0x38] sm:$0xff]
  %v37 = vld [vmem:[%s1 + $0x40] sm:$0xff]
  %v38 = vld [vmem:[%s1 + $0x48] sm:$0xff]
  %v39 = vld [vmem:[%s1 + $0x50] sm:$0xff]
  %v40 = vld [vmem:[%s1 + $0x58] sm:$0xff]
  %v41 = vld [vmem:[%s1 + $0x60] sm:$0xff]
  %v42 = vld [vmem:[%s1 + $0x68] sm:$0xff]
  %v43 = vld [vmem:[%s1 + $0x70] sm:$0xff]
  %v44 = vld [vmem:[%s1 + $0x78] sm:$0xff]
  %v45 = vld [vmem:[%s1 + $0x80] sm:$0xff]
  %v46 = vld [vmem:[%s1 + $0x88] sm:$0xff]
  %v47 = vld [vmem:[%s1 + $0x90] sm:$0xff]
  %v48 = vld [vmem:[%s1 + $0x98] sm:$0xff]
  %v49 = vld [vmem:[%s1 + $0xa0] sm:$0xff]
  %v50 = vld [vmem:[%s1 + $0xa8] sm:$0xff]
  %v51 = vld [vmem:[%s1 + $0xb0] sm:$0xff]
  %v52 = vld [vmem:[%s1 + $0xb8] sm:$0xff]
  %v53 = vld [vmem:[%s1 + $0xc0] sm:$0xff]
  %v54 = vld [vmem:[%s1 + $0xc8] sm:$0xff]
  %v55 = vld [vmem:[%s1 + $0xd0] sm:$0xff]
  %v56 = vld [vmem:[%s1 + $0xd8] sm:$0xff]
  %v57 = vld [vmem:[%s1 + $0xe0] sm:$0xff]
  %v58 = vld [vmem:[%s1 + $0xe8] sm:$0xff]
  %v59 = vld [vmem:[%s1 + $0xf0] sm:$0xff]
  %v60 = vld [vmem:[%s1 + $0xf8] sm:$0xff]
  %v61 = vld [vmem:[%s1 + $0x100] sm:$0xff]
  %v62 = vld [vmem:[%s1 + $0x108] sm:$0xff]
  %v63 = vld [vmem:[%s1 + $0x110] sm:$0xff]
  %v64 = vld [vmem:[%s1 + $0x118] sm:$0xff]
  %v65 = vld [vmem:[%s1 + $0x120] sm:$0xff]
  %v66 = vld [vmem:[%s1 + $0x128] sm:$0xff]
  %v67 = vld [vmem:[%s1 + $0x130] sm:$0xff]
  %v68 = vld [vmem:[%s1 + $0x138] sm:$0xff]
  %v69 = vld [vmem:[%s1 + $0x140] sm:$0xff]
  %v70 = vld [vmem:[%s1 + $0x148] sm:$0xff]
  %v71 = vld [vmem:[%s1 + $0x150] sm:$0xff]
  %v72 = vld [vmem:[%s1 + $0x158] sm:$0xff]
  %v73 = vld [vmem:[%s1 + $0x160] sm:$0xff]
  %v74 = vld [vmem:[%s1 + $0x168] sm:$0xff]
  %v75 = vld [vmem:[%s1 + $0x170] sm:$0xff]
  %v76 = vld [vmem:[%s1 + $0x178] sm:$0xff]
  %v77 = vld [vmem:[%s1 + $0x180] sm:$0xff]
  %v78 = vld [vmem:[%s1 + $0x188] sm:$0xff]
  %v79 = vld [vmem:[%s1 + $0x190] sm:$0xff]
  %v80 = vld [vmem:[%s1 + $0x198] sm:$0xff]
  %v81 = vld [vmem:[%s1 + $0x1a0] sm:$0xff]
  %v82 = vld [vmem:[%s1 + $0x1a8] sm:$0xff]
  %v83 = vld [vmem:[%s1 + $0x1b0] sm:$0xff]
  %v84 = vld [vmem:[%s1 + $0x1b8] sm:$0xff]
  %v85 = vld [vmem:[%s1 + $0x1c0] sm:$0xff]
  %v86 = vld [vmem:[%s1 + $0x1c8] sm:$0xff]
  %v87 = vld [vmem:[%s1 + $0x1d0] sm:$0xff]
  %v88 = vld [vmem:[%s1 + $0x1d8] sm:$0xff]
  %v89 = vld [vmem:[%s1 + $0x1e0] sm:$0xff]
  %v90 = vld [vmem:[%s1 + $0x1e8] sm:$0xff]
  %v91 = vld [vmem:[%s1 + $0x1f0] sm:$0xff]
  %v92 = vld [vmem:[%s1 + $0x1f8] sm:$0xff]
  %v93 = vld [vmem:[%s1 + $0x200] sm:$0xff]
  %v94 = vld [vmem:[%s1 + $0x208] sm:$0xff]
  %v95 = vld [vmem:[%s1 + $0x210] sm:$0xff]
  %v96 = vld [vmem:[%s1 + $0x218] sm:$0xff]
  %v97 = vld [vmem:[%s1 + $0x220] sm:$0xff]
  %v98 = vld [vmem:[%s1 + $0x228] sm:$0xff]
  %v99 = vld [vmem:[%s1 + $0x230] sm:$0xff]
  %v100 = vld [vmem:[%s1 + $0x238] sm:$0xff]
  %v101 = vld [vmem:[%s1 + $0x240] sm:$0xff]
  %v102 = vld [vmem:[%s1 + $0x248] sm:$0xff]
  %v103 = vld [vmem:[%s1 + $0x250] sm:$0xff]
  %v104 = vld [vmem:[%s1 + $0x258] sm:$0xff]
  %v105 = vld [vmem:[%s1 + $0x260] sm:$0xff]
  %v106 = vld [vmem:[%s1 + $0x268] sm:$0xff]
  %v107 = vld [vmem:[%s1 + $0x270] sm:$0xff]
  %v108 = vld [vmem:[%s1 + $0x278] sm:$0xff]
  %v109 = vld [vmem:[%s1 + $0x280] sm:$0xff]
  %v110 = vld [vmem:[%s1 + $0x288] sm:$0xff]
  %v111 = vld [vmem:[%s1 + $0x290] sm:$0xff]
  %v112 = vld [vmem:[%s1 + $0x298] sm:$0xff]
  %v113 = vld [vmem:[%s1 + $0x2a0] sm:$0xff]
  %v114 = vld [vmem:[%s1 + $0x2a8] sm:$0xff]
  %v115 = vld [vmem:[%s1 + $0x2b0] sm:$0xff]
  %v116 = vld [vmem:[%s1 + $0x2b8] sm:$0xff]
  %v117 = vld [vmem:[%s1 + $0x2c0] sm:$0xff]
  %v118 = vld [vmem:[%s1 + $0x2c8] sm:$0xff]
  %v119 = vld [vmem:[%s1 + $0x2d0] sm:$0xff]
  %v120 = vld [vmem:[%s1 + $0x2d8] sm:$0xff]
  %v121 = vld [vmem:[%s1 + $0x2e0] sm:$0xff]
  %v122 = vld [vmem:[%s1 + $0x2e8] sm:$0xff]
  %v123 = vld [vmem:[%s1 + $0x2f0] sm:$0xff]
  %v124 = vld [vmem:[%s1 + $0x2f8] sm:$0xff]
  %v125 = vld [vmem:[%s1 + $0x300] sm:$0xff]
  %v126 = vld [vmem:[%s1 + $0x308] sm:$0xff]
  %v127 = vld [vmem:[%s2] sm:$0x3]
  %v129 = vlaneseq
  %v130 = vshrl.u32 %v129, 7
  %v131 = vsub.s32 0, %v130
  %v132 = vrot.slane %v127, %v131
  %v133 = vlaneseq
  %v134 = vshrl.u32 %v133, 7
  %v135 = vsub.s32 1, %v134
  %v136 = vrot.slane %v127, %v135
  %v237 = vunpack.c.l.b16 %v29
  %v238 = vunpack.c.h.b16 %v29
  %v239 = vunpack.c.l.b16 %v30
  %v240 = vunpack.c.h.b16 %v30
  %v241 = vunpack.c.l.b16 %v31
  %v242 = vunpack.c.h.b16 %v31
  %v243 = vunpack.c.l.b16 %v32
  %v244 = vunpack.c.h.b16 %v32
  %v245 = vunpack.c.l.b16 %v33
  %v246 = vunpack.c.h.b16 %v33
  %v247 = vunpack.c.l.b16 %v34
  %v248 = vunpack.c.h.b16 %v34
  %v249 = vunpack.c.l.b16 %v35
  %v250 = vunpack.c.h.b16 %v35
  %v251 = vunpack.c.l.b16 %v36
  %v252 = vunpack.c.h.b16 %v36
  %v253 = vunpack.c.l.b16 %v37
  %v254 = vunpack.c.h.b16 %v37
  %v255 = vunpack.c.l.b16 %v38
  %v256 = vunpack.c.h.b16 %v38
  %v257 = vunpack.c.l.b16 %v39
  %v258 = vunpack.c.h.b16 %v39
  %v259 = vunpack.c.l.b16 %v40
  %v260 = vunpack.c.h.b16 %v40
  %v261 = vunpack.c.l.b16 %v41
  %v262 = vunpack.c.h.b16 %v41
  %v263 = vunpack.c.l.b16 %v42
  %v264 = vunpack.c.h.b16 %v42
  %v265 = vunpack.c.l.b16 %v43
  %v266 = vunpack.c.h.b16 %v43
  %v267 = vunpack.c.l.b16 %v44
  %v268 = vunpack.c.h.b16 %v44
  %v269 = vunpack.c.l.b16 %v45
  %v270 = vunpack.c.h.b16 %v45
  %v271 = vunpack.c.l.b16 %v46
  %v272 = vunpack.c.h.b16 %v46
  %v273 = vunpack.c.l.b16 %v47
  %v274 = vunpack.c.h.b16 %v47
  %v275 = vunpack.c.l.b16 %v48
  %v276 = vunpack.c.h.b16 %v48
  %v277 = vunpack.c.l.b16 %v49
  %v278 = vunpack.c.h.b16 %v49
  %v279 = vunpack.c.l.b16 %v50
  %v280 = vunpack.c.h.b16 %v50
  %v281 = vunpack.c.l.b16 %v51
  %v282 = vunpack.c.h.b16 %v51
  %v283 = vunpack.c.l.b16 %v52
  %v284 = vunpack.c.h.b16 %v52
  %v285 = vunpack.c.l.b16 %v53
  %v286 = vunpack.c.h.b16 %v53
  %v287 = vunpack.c.l.b16 %v54
  %v288 = vunpack.c.h.b16 %v54
  %v289 = vunpack.c.l.b16 %v55
  %v290 = vunpack.c.h.b16 %v55
  %v291 = vunpack.c.l.b16 %v56
  %v292 = vunpack.c.h.b16 %v56
  %v293 = vunpack.c.l.b16 %v57
  %v294 = vunpack.c.h.b16 %v57
  %v295 = vunpack.c.l.b16 %v58
  %v296 = vunpack.c.h.b16 %v58
  %v297 = vunpack.c.l.b16 %v59
  %v298 = vunpack.c.h.b16 %v59
  %v299 = vunpack.c.l.b16 %v60
  %v300 = vunpack.c.h.b16 %v60
  %v301 = vunpack.c.l.b16 %v61
  %v302 = vunpack.c.h.b16 %v61
  %v303 = vunpack.c.l.b16 %v62
  %v304 = vunpack.c.h.b16 %v62
  %v305 = vunpack.c.l.b16 %v63
  %v306 = vunpack.c.h.b16 %v63
  %v307 = vunpack.c.l.b16 %v64
  %v308 = vunpack.c.h.b16 %v64
  %v309 = vunpack.c.l.b16 %v65
  %v310 = vunpack.c.h.b16 %v65
  %v311 = vunpack.c.l.b16 %v66
  %v312 = vunpack.c.h.b16 %v66
  %v313 = vunpack.c.l.b16 %v67
  %v314 = vunpack.c.h.b16 %v67
  %v315 = vunpack.c.l.b16 %v68
  %v316 = vunpack.c.h.b16 %v68
  %v317 = vunpack.c.l.b16 %v69
  %v318 = vunpack.c.h.b16 %v69
  %v319 = vunpack.c.l.b16 %v70
  %v320 = vunpack.c.h.b16 %v70
  %v321 = vunpack.c.l.b16 %v71
  %v322 = vunpack.c.h.b16 %v71
  %v323 = vunpack.c.l.b16 %v72
  %v324 = vunpack.c.h.b16 %v72
  %v325 = vunpack.c.l.b16 %v73
  %v326 = vunpack.c.h.b16 %v73
  %v327 = vunpack.c.l.b16 %v74
  %v328 = vunpack.c.h.b16 %v74
  %v329 = vunpack.c.l.b16 %v75
  %v330 = vunpack.c.h.b16 %v75
  %v331 = vunpack.c.l.b16 %v76
  %v332 = vunpack.c.h.b16 %v76
  %v333 = vunpack.c.l.b16 %v77
  %v334 = vunpack.c.h.b16 %v77
  %v335 = vunpack.c.l.b16 %v78
  %v336 = vunpack.c.h.b16 %v78
  %v337 = vunpack.c.l.b16 %v79
  %v338 = vunpack.c.h.b16 %v79
  %v339 = vunpack.c.l.b16 %v80
  %v340 = vunpack.c.h.b16 %v80
  %v341 = vunpack.c.l.b16 %v81
  %v342 = vunpack.c.h.b16 %v81
  %v343 = vunpack.c.l.b16 %v82
  %v344 = vunpack.c.h.b16 %v82
  %v345 = vunpack.c.l.b16 %v83
  %v346 = vunpack.c.h.b16 %v83
  %v347 = vunpack.c.l.b16 %v84
  %v348 = vunpack.c.h.b16 %v84
  %v349 = vunpack.c.l.b16 %v85
  %v350 = vunpack.c.h.b16 %v85
  %v351 = vunpack.c.l.b16 %v86
  %v352 = vunpack.c.h.b16 %v86
  %v353 = vunpack.c.l.b16 %v87
  %v354 = vunpack.c.h.b16 %v87
  %v355 = vunpack.c.l.b16 %v88
  %v356 = vunpack.c.h.b16 %v88
  %v357 = vunpack.c.l.b16 %v89
  %v358 = vunpack.c.h.b16 %v89
  %v359 = vunpack.c.l.b16 %v90
  %v360 = vunpack.c.h.b16 %v90
  %v361 = vunpack.c.l.b16 %v91
  %v362 = vunpack.c.h.b16 %v91
  %v363 = vunpack.c.l.b16 %v92
  %v364 = vunpack.c.h.b16 %v92
  %v365 = vunpack.c.l.b16 %v93
  %v366 = vunpack.c.h.b16 %v93
  %v367 = vunpack.c.l.b16 %v94
  %v368 = vunpack.c.h.b16 %v94
  %v369 = vunpack.c.l.b16 %v95
  %v370 = vunpack.c.h.b16 %v95
  %v371 = vunpack.c.l.b16 %v96
  %v372 = vunpack.c.h.b16 %v96
  %v373 = vunpack.c.l.b16 %v97
  %v374 = vunpack.c.h.b16 %v97
  %v375 = vunpack.c.l.b16 %v98
  %v376 = vunpack.c.h.b16 %v98
  %v377 = vunpack.c.l.b16 %v99
  %v378 = vunpack.c.h.b16 %v99
  %v379 = vunpack.c.l.b16 %v100
  %v380 = vunpack.c.h.b16 %v100
  %v381 = vunpack.c.l.b16 %v101
  %v382 = vunpack.c.h.b16 %v101
  %v383 = vunpack.c.l.b16 %v102
  %v384 = vunpack.c.h.b16 %v102
  %v385 = vunpack.c.l.b16 %v103
  %v386 = vunpack.c.h.b16 %v103
  %v387 = vunpack.c.l.b16 %v104
  %v388 = vunpack.c.h.b16 %v104
  %v389 = vunpack.c.l.b16 %v105
  %v390 = vunpack.c.h.b16 %v105
  %v391 = vunpack.c.l.b16 %v106
  %v392 = vunpack.c.h.b16 %v106
  %v393 = vunpack.c.l.b16 %v107
  %v394 = vunpack.c.h.b16 %v107
  %v395 = vunpack.c.l.b16 %v108
  %v396 = vunpack.c.h.b16 %v108
  %v397 = vunpack.c.l.b16 %v109
  %v398 = vunpack.c.h.b16 %v109
  %v399 = vunpack.c.l.b16 %v110
  %v400 = vunpack.c.h.b16 %v110
  %v401 = vunpack.c.l.b16 %v111
  %v402 = vunpack.c.h.b16 %v111
  %v403 = vunpack.c.l.b16 %v112
  %v404 = vunpack.c.h.b16 %v112
  %v405 = vunpack.c.l.b16 %v113
  %v406 = vunpack.c.h.b16 %v113
  %v407 = vunpack.c.l.b16 %v114
  %v408 = vunpack.c.h.b16 %v114
  %v409 = vunpack.c.l.b16 %v115
  %v410 = vunpack.c.h.b16 %v115
  %v411 = vunpack.c.l.b16 %v116
  %v412 = vunpack.c.h.b16 %v116
  %v413 = vunpack.c.l.b16 %v117
  %v414 = vunpack.c.h.b16 %v117
  %v415 = vunpack.c.l.b16 %v118
  %v416 = vunpack.c.h.b16 %v118
  %v417 = vunpack.c.l.b16 %v119
  %v418 = vunpack.c.h.b16 %v119
  %v419 = vunpack.c.l.b16 %v120
  %v420 = vunpack.c.h.b16 %v120
  %v421 = vunpack.c.l.b16 %v121
  %v422 = vunpack.c.h.b16 %v121
  %v423 = vunpack.c.l.b16 %v122
  %v424 = vunpack.c.h.b16 %v122
  %v425 = vunpack.c.l.b16 %v123
  %v426 = vunpack.c.h.b16 %v123
  %v427 = vunpack.c.l.b16 %v124
  %v428 = vunpack.c.h.b16 %v124
  %v429 = vunpack.c.l.b16 %v125
  %v430 = vunpack.c.h.b16 %v125
  %v431 = vunpack.c.l.b16 %v126
  %v432 = vunpack.c.h.b16 %v126
  %v433 = vpack.c.b16 %v239, %v237
  %v434 = vpack.c.b16 %v240, %v238
  %v435 = vpack.c.b16 %v243, %v241
  %v436 = vpack.c.b16 %v244, %v242
  %v437 = vpack.c.b16 %v247, %v245
  %v438 = vpack.c.b16 %v248, %v246
  %v439 = vpack.c.b16 %v251, %v249
  %v440 = vpack.c.b16 %v252, %v250
  %v441 = vpack.c.b16 %v255, %v253
  %v442 = vpack.c.b16 %v256, %v254
  %v443 = vpack.c.b16 %v259, %v257
  %v444 = vpack.c.b16 %v260, %v258
  %v445 = vpack.c.b16 %v263, %v261
  %v446 = vpack.c.b16 %v264, %v262
  %v447 = vpack.c.b16 %v267, %v265
  %v448 = vpack.c.b16 %v268, %v266
  %v449 = vpack.c.b16 %v271, %v269
  %v450 = vpack.c.b16 %v272, %v270
  %v451 = vpack.c.b16 %v275, %v273
  %v452 = vpack.c.b16 %v276, %v274
  %v453 = vpack.c.b16 %v279, %v277
  %v454 = vpack.c.b16 %v280, %v278
  %v455 = vpack.c.b16 %v283, %v281
  %v456 = vpack.c.b16 %v284, %v282
  %v457 = vpack.c.b16 %v287, %v285
  %v458 = vpack.c.b16 %v288, %v286
  %v459 = vpack.c.b16 %v291, %v289
  %v460 = vpack.c.b16 %v292, %v290
  %v461 = vpack.c.b16 %v295, %v293
  %v462 = vpack.c.b16 %v296, %v294
  %v463 = vpack.c.b16 %v299, %v297
  %v464 = vpack.c.b16 %v300, %v298
  %v465 = vpack.c.b16 %v303, %v301
  %v466 = vpack.c.b16 %v304, %v302
  %v467 = vpack.c.b16 %v307, %v305
  %v468 = vpack.c.b16 %v308, %v306
  %v469 = vpack.c.b16 %v311, %v309
  %v470 = vpack.c.b16 %v312, %v310
  %v471 = vpack.c.b16 %v315, %v313
  %v472 = vpack.c.b16 %v316, %v314
  %v473 = vpack.c.b16 %v319, %v317
  %v474 = vpack.c.b16 %v320, %v318
  %v475 = vpack.c.b16 %v323, %v321
  %v476 = vpack.c.b16 %v324, %v322
  %v477 = vpack.c.b16 %v327, %v325
  %v478 = vpack.c.b16 %v328, %v326
  %v479 = vpack.c.b16 %v331, %v329
  %v480 = vpack.c.b16 %v332, %v330
  %v481 = vpack.c.b16 %v335, %v333
  %v482 = vpack.c.b16 %v336, %v334
  %v483 = vpack.c.b16 %v339, %v337
  %v484 = vpack.c.b16 %v340, %v338
  %v485 = vpack.c.b16 %v343, %v341
  %v486 = vpack.c.b16 %v344, %v342
  %v487 = vpack.c.b16 %v347, %v345
  %v488 = vpack.c.b16 %v348, %v346
  %v489 = vpack.c.b16 %v351, %v349
  %v490 = vpack.c.b16 %v352, %v350
  %v491 = vpack.c.b16 %v355, %v353
  %v492 = vpack.c.b16 %v356, %v354
  %v493 = vpack.c.b16 %v359, %v357
  %v494 = vpack.c.b16 %v360, %v358
  %v495 = vpack.c.b16 %v363, %v361
  %v496 = vpack.c.b16 %v364, %v362
  %v497 = vpack.c.b16 %v367, %v365
  %v498 = vpack.c.b16 %v368, %v366
  %v499 = vpack.c.b16 %v371, %v369
  %v500 = vpack.c.b16 %v372, %v370
  %v501 = vpack.c.b16 %v375, %v373
  %v502 = vpack.c.b16 %v376, %v374
  %v503 = vpack.c.b16 %v379, %v377
  %v504 = vpack.c.b16 %v380, %v378
  %v505 = vpack.c.b16 %v383, %v381
  %v506 = vpack.c.b16 %v384, %v382
  %v507 = vpack.c.b16 %v387, %v385
  %v508 = vpack.c.b16 %v388, %v386
  %v509 = vpack.c.b16 %v391, %v389
  %v510 = vpack.c.b16 %v392, %v390
  %v511 = vpack.c.b16 %v395, %v393
  %v512 = vpack.c.b16 %v396, %v394
  %v513 = vpack.c.b16 %v399, %v397
  %v514 = vpack.c.b16 %v400, %v398
  %v515 = vpack.c.b16 %v403, %v401
  %v516 = vpack.c.b16 %v404, %v402
  %v517 = vpack.c.b16 %v407, %v405
  %v518 = vpack.c.b16 %v408, %v406
  %v519 = vpack.c.b16 %v411, %v409
  %v520 = vpack.c.b16 %v412, %v410
  %v521 = vpack.c.b16 %v415, %v413
  %v522 = vpack.c.b16 %v416, %v414
  %v523 = vpack.c.b16 %v419, %v417
  %v524 = vpack.c.b16 %v420, %v418
  %v525 = vpack.c.b16 %v423, %v421
  %v526 = vpack.c.b16 %v424, %v422
  %v527 = vpack.c.b16 %v427, %v425
  %v528 = vpack.c.b16 %v428, %v426
  %v529 = vpack.c.b16 %v431, %v429
  %v530 = vpack.c.b16 %v432, %v430
  %vm629 = vcmask 130048
  %v631 = vsel %vm629, %v28, 0
  %633 = vmatprep.subr.bf16.mxu0 %v448
  %634 = vmatpush1.bf16.msra.mxu0 %v447
  %635 = vmatprep.subr.bf16.mxu0 %v446
  %636 = vmatpush1.bf16.msra.mxu0 %v445
  %637 = vmatprep.subr.bf16.mxu0 %v444
  %638 = vmatpush1.bf16.msra.mxu0 %v443
  %639 = vmatprep.subr.bf16.mxu0 %v442
  %640 = vmatpush1.bf16.msra.mxu0 %v441
  %641 = vmatprep.subr.bf16.mxu0 %v440
  %642 = vmatpush1.bf16.msra.mxu0 %v439
  %643 = vmatprep.subr.bf16.mxu0 %v438
  %644 = vmatpush1.bf16.msra.mxu0 %v437
  %645 = vmatprep.subr.bf16.mxu0 %v436
  %646 = vmatpush1.bf16.msra.mxu0 %v435
  %647 = vmatprep.subr.bf16.mxu0 %v434
  %648 = vmatpush1.bf16.msra.mxu0 %v433
  %649 = vmatprep.subr.bf16.mxu0 %v464
  %650 = vmatpush2.bf16.msra.mxu0 %v463
  %651 = vmatprep.subr.bf16.mxu0 %v462
  %652 = vmatpush2.bf16.msra.mxu0 %v461
  %653 = vmatprep.subr.bf16.mxu0 %v460
  %654 = vmatpush2.bf16.msra.mxu0 %v459
  %655 = vmatprep.subr.bf16.mxu0 %v458
  %656 = vmatpush2.bf16.msra.mxu0 %v457
  %657 = vmatprep.subr.bf16.mxu0 %v456
  %658 = vmatpush2.bf16.msra.mxu0 %v455
  %659 = vmatprep.subr.bf16.mxu0 %v454
  %660 = vmatpush2.bf16.msra.mxu0 %v453
  %661 = vmatprep.subr.bf16.mxu0 %v452
  %662 = vmatpush2.bf16.msra.mxu0 %v451
  %663 = vmatprep.subr.bf16.mxu0 %v450
  %664 = vmatpush2.bf16.msra.mxu0 %v449
  %665 = vmatprep.mubr.bf16.mxu0 %v23
  %666 = vmatmul.mubr.bf16.gmra.mxu0 %v22
  %v667 = vpop.f32.mrf.mxu0
  %v668 = vadd.f32 %v132, %v667
  %v669 = vpop.f32.mrf.mxu0
  %v670 = vadd.f32 %v136, %v669
  %v671 = vpop.f32.mrf.mxu0
  %v672 = vpop.f32.mrf.mxu0
  %673 = vdwg.mxu0
  %674 = vmatprep.subr.bf16.mxu0 %v480
  %675 = vmatpush1.bf16.msra.mxu0 %v479
  %676 = vmatprep.subr.bf16.mxu0 %v478
  %677 = vmatpush1.bf16.msra.mxu0 %v477
  %678 = vmatprep.subr.bf16.mxu0 %v476
  %679 = vmatpush1.bf16.msra.mxu0 %v475
  %680 = vmatprep.subr.bf16.mxu0 %v474
  %681 = vmatpush1.bf16.msra.mxu0 %v473
  %682 = vmatprep.subr.bf16.mxu0 %v472
  %683 = vmatpush1.bf16.msra.mxu0 %v471
  %684 = vmatprep.subr.bf16.mxu0 %v470
  %685 = vmatpush1.bf16.msra.mxu0 %v469
  %686 = vmatprep.subr.bf16.mxu0 %v468
  %687 = vmatpush1.bf16.msra.mxu0 %v467
  %688 = vmatprep.subr.bf16.mxu0 %v466
  %689 = vmatpush1.bf16.msra.mxu0 %v465
  %690 = vmatprep.subr.bf16.mxu0 %v496
  %691 = vmatpush2.bf16.msra.mxu0 %v495
  %692 = vmatprep.subr.bf16.mxu0 %v494
  %693 = vmatpush2.bf16.msra.mxu0 %v493
  %694 = vmatprep.subr.bf16.mxu0 %v492
  %695 = vmatpush2.bf16.msra.mxu0 %v491
  %696 = vmatprep.subr.bf16.mxu0 %v490
  %697 = vmatpush2.bf16.msra.mxu0 %v489
  %698 = vmatprep.subr.bf16.mxu0 %v488
  %699 = vmatpush2.bf16.msra.mxu0 %v487
  %700 = vmatprep.subr.bf16.mxu0 %v486
  %701 = vmatpush2.bf16.msra.mxu0 %v485
  %702 = vmatprep.subr.bf16.mxu0 %v484
  %703 = vmatpush2.bf16.msra.mxu0 %v483
  %704 = vmatprep.subr.bf16.mxu0 %v482
  %705 = vmatpush2.bf16.msra.mxu0 %v481
  %706 = vmatprep.mubr.bf16.mxu0 %v25
  %707 = vmatmul.mubr.bf16.gmra.mxu0 %v24
  %v708 = vpop.f32.mrf.mxu0
  %v709 = vadd.f32 %v668, %v708
  %v710 = vpop.f32.mrf.mxu0
  %v711 = vadd.f32 %v670, %v710
  %v712 = vpop.f32.mrf.mxu0
  %v713 = vpop.f32.mrf.mxu0
  %714 = vdwg.mxu0
  %715 = vmatprep.subr.bf16.mxu0 %v512
  %716 = vmatpush1.bf16.msra.mxu0 %v511
  %717 = vmatprep.subr.bf16.mxu0 %v510
  %718 = vmatpush1.bf16.msra.mxu0 %v509
  %719 = vmatprep.subr.bf16.mxu0 %v508
  %720 = vmatpush1.bf16.msra.mxu0 %v507
  %721 = vmatprep.subr.bf16.mxu0 %v506
  %722 = vmatpush1.bf16.msra.mxu0 %v505
  %723 = vmatprep.subr.bf16.mxu0 %v504
  %724 = vmatpush1.bf16.msra.mxu0 %v503
  %725 = vmatprep.subr.bf16.mxu0 %v502
  %726 = vmatpush1.bf16.msra.mxu0 %v501
  %727 = vmatprep.subr.bf16.mxu0 %v500
  %728 = vmatpush1.bf16.msra.mxu0 %v499
  %729 = vmatprep.subr.bf16.mxu0 %v498
  %730 = vmatpush1.bf16.msra.mxu0 %v497
  %731 = vmatprep.subr.bf16.mxu0 %v528
  %732 = vmatpush2.bf16.msra.mxu0 %v527
  %733 = vmatprep.subr.bf16.mxu0 %v526
  %734 = vmatpush2.bf16.msra.mxu0 %v525
  %735 = vmatprep.subr.bf16.mxu0 %v524
  %736 = vmatpush2.bf16.msra.mxu0 %v523
  %737 = vmatprep.subr.bf16.mxu0 %v522
  %738 = vmatpush2.bf16.msra.mxu0 %v521
  %739 = vmatprep.subr.bf16.mxu0 %v520
  %740 = vmatpush2.bf16.msra.mxu0 %v519
  %741 = vmatprep.subr.bf16.mxu0 %v518
  %742 = vmatpush2.bf16.msra.mxu0 %v517
  %743 = vmatprep.subr.bf16.mxu0 %v516
  %744 = vmatpush2.bf16.msra.mxu0 %v515
  %745 = vmatprep.subr.bf16.mxu0 %v514
  %746 = vmatpush2.bf16.msra.mxu0 %v513
  %747 = vmatprep.mubr.bf16.mxu0 %v27
  %748 = vmatmul.mubr.bf16.gmra.mxu0 %v26
  %v749 = vpop.f32.mrf.mxu0
  %v750 = vadd.f32 %v709, %v749
  %v751 = vpop.f32.mrf.mxu0
  %v752 = vadd.f32 %v711, %v751
  %v753 = vpop.f32.mrf.mxu0
  %v754 = vpop.f32.mrf.mxu0
  %755 = vdwg.mxu0
  %756 = vmatprep.subr.bf16.mxu0 0
  %757 = vmatpush1.bf16.msra.mxu0 0
  %758 = vmatprep.subr.bf16.mxu0 0
  %759 = vmatpush1.bf16.msra.mxu0 0
  %760 = vmatprep.subr.bf16.mxu0 0
  %761 = vmatpush1.bf16.msra.mxu0 0
  %762 = vmatprep.subr.bf16.mxu0 0
  %763 = vmatpush1.bf16.msra.mxu0 0
  %764 = vmatprep.subr.bf16.mxu0 0
  %765 = vmatpush1.bf16.msra.mxu0 0
  %766 = vmatprep.subr.bf16.mxu0 0
  %767 = vmatpush1.bf16.msra.mxu0 0
  %768 = vmatprep.subr.bf16.mxu0 0
  %769 = vmatpush1.bf16.msra.mxu0 0
  %770 = vmatprep.subr.bf16.mxu0 %v530
  %771 = vmatpush1.bf16.msra.mxu0 %v529
  %772 = vmatprep.subr.bf16.mxu0 0
  %773 = vmatpush2.bf16.msra.mxu0 0
  %774 = vmatprep.subr.bf16.mxu0 0
  %775 = vmatpush2.bf16.msra.mxu0 0
  %776 = vmatprep.subr.bf16.mxu0 0
  %777 = vmatpush2.bf16.msra.mxu0 0
  %778 = vmatprep.subr.bf16.mxu0 0
  %779 = vmatpush2.bf16.msra.mxu0 0
  %780 = vmatprep.subr.bf16.mxu0 0
  %781 = vmatpush2.bf16.msra.mxu0 0
  %782 = vmatprep.subr.bf16.mxu0 0
  %783 = vmatpush2.bf16.msra.mxu0 0
  %784 = vmatprep.subr.bf16.mxu0 0
  %785 = vmatpush2.bf16.msra.mxu0 0
  %786 = vmatprep.subr.bf16.mxu0 0
  %787 = vmatpush2.bf16.msra.mxu0 0
  %788 = vmatprep.mubr.bf16.mxu0 0
  %789 = vmatmul.mubr.bf16.gmra.mxu0 %v631
  %v790 = vpop.f32.mrf.mxu0
  %v791 = vadd.f32 %v750, %v790
  %v792 = vpop.f32.mrf.mxu0
  %v793 = vadd.f32 %v752, %v792
  %v794 = vpop.f32.mrf.mxu0
  %v795 = vpop.f32.mrf.mxu0
  %796 = vdwg.mxu0
  %797 = vst [vmem:[%s3] sm:$0xff] %v791
  %798 = vst [vmem:[%s3 + $0x8] sm:$0xff] %v793
  // Predicated region
  $region14: #{feature_extractor.1} parent=0 // pred_check
    _
  $region15: #{feature_extractor.1} parent=0 // pred_check_branch
    %800 = sbr.rel (0) target = $region17
  $region16: #{feature_extractor.1} parent=0 // pred_region
    _
  $region17: #{feature_extractor.1} parent=0 // pred_fallthru
    _
  // Predicated region
  $region18: #{feature_extractor.1} parent=0 // pred_check
    _
  $region19: #{feature_extractor.1} parent=0 // pred_check_branch
    %802 = sbr.rel (0) target = $region21
  $region20: #{feature_extractor.1} parent=0 // pred_region
    _
  $region21: #{feature_extractor.1} parent=0 // pred_fallthru
    _

</llo_original>
